<compile_context>
chip_gen: v7x
topology: tpu7x:2x2x1
jax: 0.10.0
libtpu: 0.0.40
codegen_flags: <defaults>
</compile_context>

<pallas_src>
import numpy as np
import jax
import jax.numpy as jnp
from jax import lax
from jax.experimental import pallas as pl
from jax.experimental.pallas import tpu as pltpu


# ----------------------------------------------------------------------------
# Tree construction (pure Python, mirrors ALNet.create_full_tree / _split /
# visit_nodes traversal order with deterministic ops: root_op='max', ops='alt')
# ----------------------------------------------------------------------------
def build_full_tree(layer_count: int, root_op: str = "max", ops: str = "alt"):
    """Returns (tree, num_pieces). Tree nodes: leaf = piece_id (int),
    internal = ('min'|'max', left, right)."""
    tree = [0]                       # mutable: leaf = [id], internal = [op, l, r]
    num_pieces = 1
    is_min = (root_op == "min")
    lc = layer_count
    while lc > 1:
        # gather (parent, leaf) pairs with the same stack DFS as visit_nodes
        leaves = []
        stack = [(None, tree)]
        while stack:
            parent, child = stack.pop()
            if len(child) == 1:
                leaves.append((parent, child))
            else:
                stack.append((child, child[1]))
                stack.append((child, child[2]))
        for parent, leaf in leaves:
            new_id = num_pieces
            num_pieces += 1
            op = "min" if is_min else "max"
            new_node = [op, [leaf[0]], [new_id]]
            if parent is None:
                tree = new_node
            elif parent[1] is leaf:
                parent[1] = new_node
            else:
                parent[2] = new_node
        if ops == "alt":
            is_min = not is_min
        elif ops == "min":
            is_min = True
        elif ops == "max":
            is_min = False
        lc -= 1

    def freeze(node):
        if len(node) == 1:
            return node[0]
        return (node[0], freeze(node[1]), freeze(node[2]))

    return freeze(tree), num_pieces


def _round_up(a: int, m: int) -> int:
    return ((a + m - 1) // m) * m


# ----------------------------------------------------------------------------
# Pallas kernel: affine evaluation of all pieces + min/max tree reduction
# (pieces on sublanes, batch on lanes -> lane-dense outputs)
# ----------------------------------------------------------------------------
def _make_kernel(tree, num_features: int, num_pieces: int, use_mxu: bool):
    F = num_features
    P = num_pieces

    def kernel(w_ref, x_ref, out_ref, resp_ref):
        # w_ref: (P, F+1), bias folded into the last column.
        # x_ref: (F, TB) on the VPU path; (F+1, TB) with a ones row on MXU path.
        TB = x_ref.shape[1]

        if use_mxu:
            # Single MXU contraction in natural layout; bias folded via the
            # ones row.  Full f32 precision so the reference tolerance holds.
            scores = jnp.dot(w_ref[...], x_ref[...],
                             preferred_element_type=jnp.float32,
                             precision=lax.Precision.HIGHEST)           # (P, TB)
        else:
            # VPU path for sub-MXU-tile shapes: bias init + unrolled
            # broadcast-multiply-accumulate over the F feature rows.
            wv = w_ref[...]                                             # (P, F+1)
            xv = x_ref[...]                                             # (F, TB)
            acc = jnp.broadcast_to(wv[:, F:F + 1], (P, TB)).astype(jnp.float32)
            for f in range(F):
                acc = acc + wv[:, f:f + 1] * xv[f:f + 1, :]
            scores = acc                                                # (P, TB)

        def eval_node(node):
            if isinstance(node, int):
                val = scores[node:node + 1, :]                          # (1, TB)
                pid = jnp.full((1, TB), node, dtype=jnp.int32)
                return val, pid
            op, left, right = node
            lv, lid = eval_node(left)
            rv, rid = eval_node(right)
            if op == "min":
                return jnp.minimum(lv, rv), jnp.where(lv <= rv, lid, rid)
            return jnp.maximum(lv, rv), jnp.where(lv >= rv, lid, rid)

        val, pid = eval_node(tree)
        out_ref[...] = val.astype(out_ref.dtype)
        resp_ref[...] = pid

    return kernel


def _choose_lane_tile(b_padded: int, cap: int) -> int:
    """Largest multiple of 128 <= cap that divides b_padded; prefer >=2 grid
    steps (v7x megacore) when the whole batch would otherwise be one tile."""
    tb = max((min(cap, b_padded) // 128) * 128, 128)
    while b_padded % tb:
        tb -= 128
    if b_padded // tb < 2 and b_padded >= 256 and b_padded % 256 == 0:
        tb = b_padded // 2
    return tb


def aln_forward(x, w, b, tree, *, max_lane_tile: int = 64 * 1024):
    """x: (B, F) f32, w: (P, F) f32, b: (1, P) f32.
    Returns (result (B, 1) f32, responsible_pieces (B, 1) i32)."""
    B, F = x.shape
    P = w.shape[0]

    # Fold bias into the weight matrix as an extra column (tiny, one-time).
    w_aug = jnp.concatenate([w, b.reshape(P, 1)], axis=1)               # (P, F+1)

    # Lane-dense tiling of the batch axis.
    Bp = _round_up(B, 128)
    TB = _choose_lane_tile(Bp, max_lane_tile)
    grid = (Bp // TB,)

    # MXU only when the contraction dim is at least an MXU tile; otherwise the
    # VPU broadcast-MAC wins (no fill/drain latency).
    use_mxu = (F + 1) >= 128 and P >= 8

    # Batch on lanes; pad+transpose is a single fused XLA copy of x.  The ones
    # row is only appended on the MXU path (VPU path never reads it).
    xt = jnp.pad(x, ((0, Bp - B), (0, 0))).T                            # (F, Bp)
    if use_mxu:
        xt = jnp.concatenate([xt, jnp.ones((1, Bp), x.dtype)], axis=0)  # (F+1, Bp)
    x_rows = xt.shape[0]

    kernel = _make_kernel(tree, F, P, use_mxu)

    # Explicit VMEM budget: double-buffered x tile + two lane-dense outputs
    # (8-sublane padded) + resident weights, with 2x headroom, clamped to the
    # smallest physical VMEM (v7x: 64 MiB) and at least the v5e default.
    xr_pad = _round_up(x_rows, 8)
    vmem_bytes = 2 * xr_pad * TB * 4                 # x, double buffered
    vmem_bytes += 2 * 2 * 8 * TB * 4                 # value + id outputs
    vmem_bytes += 2 * _round_up(P, 8) * _round_up(F + 1, 128) * 4
    vmem_limit = int(min(max(2 * vmem_bytes, 16 << 20), 64 << 20))

    out_val, out_resp = pl.pallas_call(
        kernel,
        out_shape=(
            jax.ShapeDtypeStruct((1, Bp), x.dtype),
            jax.ShapeDtypeStruct((1, Bp), jnp.int32),
        ),
        grid=grid,
        in_specs=[
            pl.BlockSpec((P, F + 1), lambda i: (0, 0)),     # weights: resident
            pl.BlockSpec((x_rows, TB), lambda i: (0, i)),   # batch-tiled x^T
        ],
        out_specs=(
            pl.BlockSpec((1, TB), lambda i: (0, i)),        # lane-dense value
            pl.BlockSpec((1, TB), lambda i: (0, i)),        # lane-dense piece id
        ),
        compiler_params=pltpu.CompilerParams(
            dimension_semantics=("parallel",),
            vmem_limit_bytes=vmem_limit),
    )(w_aug, xt)

    # Back to the module's (B, 1) convention.
    result = out_val[0, :B].reshape(B, 1)
    responsible = out_resp[0, :B].reshape(B, 1)
    return result, responsible


# ----------------------------------------------------------------------------
# Pure-JAX reference for correctness check
# ----------------------------------------------------------------------------
def aln_forward_ref(x, w, b, tree):
    B = x.shape[0]
    scores = x @ w.T + b

    def eval_node(node):
        if isinstance(node, int):
            return scores[:, node:node + 1], jnp.full((B, 1), node, jnp.int32)
        op, left, right = node
        lv, lid = eval_node(left)
        rv, rid = eval_node(right)
        if op == "min":
            return jnp.minimum(lv, rv), jnp.where(lv <= rv, lid, rid)
        return jnp.maximum(lv, rv), jnp.where(lv >= rv, lid, rid)

    return eval_node(tree)


if __name__ == "__main__":
    INPUT_FEATURES = 8
    LAYER_COUNT = 3                       # -> 4 linear pieces

    tree, num_pieces = build_full_tree(LAYER_COUNT, root_op="max", ops="alt")

    key = jax.random.PRNGKey(0)
    kx, kw, kb, kx2 = jax.random.split(key, 4)
    w = jax.random.normal(kw, (num_pieces, INPUT_FEATURES), dtype=jnp.float32)
    b = jax.random.normal(kb, (1, num_pieces), dtype=jnp.float32)

    # Small batch (single grid step) and a multi-tile batch (2 grid steps,
    # exercises the megacore-friendly tiling path).
    for kxi, batch in ((kx, 16), (kx2, 512)):
        x = jax.random.normal(kxi, (batch, INPUT_FEATURES), dtype=jnp.float32)

        result, responsible = aln_forward(x, w, b, tree)
        result = jax.block_until_ready(result)
        responsible = jax.block_until_ready(responsible)

        ref_result, ref_responsible = aln_forward_ref(x, w, b, tree)
        np.testing.assert_allclose(np.asarray(result), np.asarray(ref_result),
                                   rtol=1e-5, atol=1e-5)
        np.testing.assert_array_equal(np.asarray(responsible),
                                      np.asarray(ref_responsible))

    print("KERNEL_OK")
</pallas_src>

<mosaic_0001>
module attributes {stable_mosaic.version = 11 : i64} {
  func.func @kernel(%arg0: i32, %arg1: memref<4x9xf32, #tpu.memory_space<vmem>>, %arg2: memref<8x128xf32, #tpu.memory_space<vmem>>, %arg3: memref<1x128xf32, #tpu.memory_space<vmem>>, %arg4: memref<1x128xi32, #tpu.memory_space<vmem>>) attributes {dimension_semantics = [#tpu.dimension_semantics<parallel>], iteration_bounds = array<i64: 1>, scalar_prefetch = 0 : i64, scratch_operands = 0 : i64, tpu.core_type = #tpu.core_type<tc>, window_params = [{pipeline_mode = #tpu.pipeline_mode<synchronous>, transform_indices = @transform_0, window_bounds = array<i64: 4, 9>}, {transform_indices = @transform_1, window_bounds = array<i64: 8, 128>}, {transform_indices = @transform_2, window_bounds = array<i64: 1, 128>}, {transform_indices = @transform_3, window_bounds = array<i64: 1, 128>}]} {
    %c0 = arith.constant 0 : index
    %c0_0 = arith.constant 0 : index
    %0 = vector.load %arg1[%c0, %c0_0] : memref<4x9xf32, #tpu.memory_space<vmem>>, vector<4x9xf32>
    %c0_1 = arith.constant 0 : index
    %c0_2 = arith.constant 0 : index
    %1 = vector.load %arg2[%c0_1, %c0_2] : memref<8x128xf32, #tpu.memory_space<vmem>>, vector<8x128xf32>
    %2 = vector.extract_strided_slice %0 {offsets = [0, 8], sizes = [4, 1], strides = [1, 1]} : vector<4x9xf32> to vector<4x1xf32>
    %3 = vector.shape_cast %2 : vector<4x1xf32> to vector<4x1xf32>
    %4 = vector.broadcast %3 : vector<4x1xf32> to vector<4x128xf32>
    %5 = vector.extract_strided_slice %0 {offsets = [0, 0], sizes = [4, 1], strides = [1, 1]} : vector<4x9xf32> to vector<4x1xf32>
    %6 = vector.extract_strided_slice %1 {offsets = [0, 0], sizes = [1, 128], strides = [1, 1]} : vector<8x128xf32> to vector<1x128xf32>
    %7 = vector.broadcast %5 : vector<4x1xf32> to vector<4x128xf32>
    %8 = vector.broadcast %6 : vector<1x128xf32> to vector<4x128xf32>
    %9 = arith.mulf %7, %8 : vector<4x128xf32>
    %10 = arith.addf %4, %9 : vector<4x128xf32>
    %11 = vector.extract_strided_slice %0 {offsets = [0, 1], sizes = [4, 1], strides = [1, 1]} : vector<4x9xf32> to vector<4x1xf32>
    %12 = vector.extract_strided_slice %1 {offsets = [1, 0], sizes = [1, 128], strides = [1, 1]} : vector<8x128xf32> to vector<1x128xf32>
    %13 = vector.broadcast %11 : vector<4x1xf32> to vector<4x128xf32>
    %14 = vector.broadcast %12 : vector<1x128xf32> to vector<4x128xf32>
    %15 = arith.mulf %13, %14 : vector<4x128xf32>
    %16 = arith.addf %10, %15 : vector<4x128xf32>
    %17 = vector.extract_strided_slice %0 {offsets = [0, 2], sizes = [4, 1], strides = [1, 1]} : vector<4x9xf32> to vector<4x1xf32>
    %18 = vector.extract_strided_slice %1 {offsets = [2, 0], sizes = [1, 128], strides = [1, 1]} : vector<8x128xf32> to vector<1x128xf32>
    %19 = vector.broadcast %17 : vector<4x1xf32> to vector<4x128xf32>
    %20 = vector.broadcast %18 : vector<1x128xf32> to vector<4x128xf32>
    %21 = arith.mulf %19, %20 : vector<4x128xf32>
    %22 = arith.addf %16, %21 : vector<4x128xf32>
    %23 = vector.extract_strided_slice %0 {offsets = [0, 3], sizes = [4, 1], strides = [1, 1]} : vector<4x9xf32> to vector<4x1xf32>
    %24 = vector.extract_strided_slice %1 {offsets = [3, 0], sizes = [1, 128], strides = [1, 1]} : vector<8x128xf32> to vector<1x128xf32>
    %25 = vector.broadcast %23 : vector<4x1xf32> to vector<4x128xf32>
    %26 = vector.broadcast %24 : vector<1x128xf32> to vector<4x128xf32>
    %27 = arith.mulf %25, %26 : vector<4x128xf32>
    %28 = arith.addf %22, %27 : vector<4x128xf32>
    %29 = vector.extract_strided_slice %0 {offsets = [0, 4], sizes = [4, 1], strides = [1, 1]} : vector<4x9xf32> to vector<4x1xf32>
    %30 = vector.extract_strided_slice %1 {offsets = [4, 0], sizes = [1, 128], strides = [1, 1]} : vector<8x128xf32> to vector<1x128xf32>
    %31 = vector.broadcast %29 : vector<4x1xf32> to vector<4x128xf32>
    %32 = vector.broadcast %30 : vector<1x128xf32> to vector<4x128xf32>
    %33 = arith.mulf %31, %32 : vector<4x128xf32>
    %34 = arith.addf %28, %33 : vector<4x128xf32>
    %35 = vector.extract_strided_slice %0 {offsets = [0, 5], sizes = [4, 1], strides = [1, 1]} : vector<4x9xf32> to vector<4x1xf32>
    %36 = vector.extract_strided_slice %1 {offsets = [5, 0], sizes = [1, 128], strides = [1, 1]} : vector<8x128xf32> to vector<1x128xf32>
    %37 = vector.broadcast %35 : vector<4x1xf32> to vector<4x128xf32>
    %38 = vector.broadcast %36 : vector<1x128xf32> to vector<4x128xf32>
    %39 = arith.mulf %37, %38 : vector<4x128xf32>
    %40 = arith.addf %34, %39 : vector<4x128xf32>
    %41 = vector.extract_strided_slice %0 {offsets = [0, 6], sizes = [4, 1], strides = [1, 1]} : vector<4x9xf32> to vector<4x1xf32>
    %42 = vector.extract_strided_slice %1 {offsets = [6, 0], sizes = [1, 128], strides = [1, 1]} : vector<8x128xf32> to vector<1x128xf32>
    %43 = vector.broadcast %41 : vector<4x1xf32> to vector<4x128xf32>
    %44 = vector.broadcast %42 : vector<1x128xf32> to vector<4x128xf32>
    %45 = arith.mulf %43, %44 : vector<4x128xf32>
    %46 = arith.addf %40, %45 : vector<4x128xf32>
    %47 = vector.extract_strided_slice %0 {offsets = [0, 7], sizes = [4, 1], strides = [1, 1]} : vector<4x9xf32> to vector<4x1xf32>
    %48 = vector.extract_strided_slice %1 {offsets = [7, 0], sizes = [1, 128], strides = [1, 1]} : vector<8x128xf32> to vector<1x128xf32>
    %49 = vector.broadcast %47 : vector<4x1xf32> to vector<4x128xf32>
    %50 = vector.broadcast %48 : vector<1x128xf32> to vector<4x128xf32>
    %51 = arith.mulf %49, %50 : vector<4x128xf32>
    %52 = arith.addf %46, %51 : vector<4x128xf32>
    %53 = vector.extract_strided_slice %52 {offsets = [0, 0], sizes = [1, 128], strides = [1, 1]} : vector<4x128xf32> to vector<1x128xf32>
    %c0_i32 = arith.constant 0 : i32
    %54 = vector.broadcast %c0_i32 : i32 to vector<1x128xi32>
    %55 = vector.extract_strided_slice %52 {offsets = [3, 0], sizes = [1, 128], strides = [1, 1]} : vector<4x128xf32> to vector<1x128xf32>
    %c3_i32 = arith.constant 3 : i32
    %56 = vector.broadcast %c3_i32 : i32 to vector<1x128xi32>
    %57 = arith.minimumf %53, %55 : vector<1x128xf32>
    %58 = arith.cmpf ole, %53, %55 : vector<1x128xf32>
    %59 = arith.select %58, %54, %56 : vector<1x128xi1>, vector<1x128xi32>
    %60 = vector.extract_strided_slice %52 {offsets = [1, 0], sizes = [1, 128], strides = [1, 1]} : vector<4x128xf32> to vector<1x128xf32>
    %c1_i32 = arith.constant 1 : i32
    %61 = vector.broadcast %c1_i32 : i32 to vector<1x128xi32>
    %62 = vector.extract_strided_slice %52 {offsets = [2, 0], sizes = [1, 128], strides = [1, 1]} : vector<4x128xf32> to vector<1x128xf32>
    %c2_i32 = arith.constant 2 : i32
    %63 = vector.broadcast %c2_i32 : i32 to vector<1x128xi32>
    %64 = arith.minimumf %60, %62 : vector<1x128xf32>
    %65 = arith.cmpf ole, %60, %62 : vector<1x128xf32>
    %66 = arith.select %65, %61, %63 : vector<1x128xi1>, vector<1x128xi32>
    %67 = arith.maximumf %57, %64 : vector<1x128xf32>
    %68 = arith.cmpf oge, %57, %64 : vector<1x128xf32>
    %69 = arith.select %68, %59, %66 : vector<1x128xi1>, vector<1x128xi32>
    %c0_3 = arith.constant 0 : index
    %c0_4 = arith.constant 0 : index
    %70 = vector.load %arg3[%c0_3, %c0_4] : memref<1x128xf32, #tpu.memory_space<vmem>>, vector<1x128xf32>
    tpu.vector_store %arg3[%c0_3, %c0_4], %67 {strides = array<i32>} : memref<1x128xf32, #tpu.memory_space<vmem>>, vector<1x128xf32>,
    %c0_5 = arith.constant 0 : index
    %c0_6 = arith.constant 0 : index
    %71 = vector.load %arg4[%c0_5, %c0_6] : memref<1x128xi32, #tpu.memory_space<vmem>>, vector<1x128xi32>
    tpu.vector_store %arg4[%c0_5, %c0_6], %69 {strides = array<i32>} : memref<1x128xi32, #tpu.memory_space<vmem>>, vector<1x128xi32>,
    return
  }
  func.func @transform_0(%arg0: i32) -> (i32, i32) {
    %c0_i32 = arith.constant 0 : i32
    %c0_i32_0 = arith.constant 0 : i32
    %c0_i32_1 = arith.constant 0 : i32
    return %c0_i32, %c0_i32_0 : i32, i32
  }
  func.func @transform_1(%arg0: i32) -> (i32, i32) {
    %c0_i32 = arith.constant 0 : i32
    %c0_i32_0 = arith.constant 0 : i32
    return %c0_i32, %arg0 : i32, i32
  }
  func.func @transform_2(%arg0: i32) -> (i32, i32) {
    %c0_i32 = arith.constant 0 : i32
    %c0_i32_0 = arith.constant 0 : i32
    return %c0_i32, %arg0 : i32, i32
  }
  func.func @transform_3(%arg0: i32) -> (i32, i32) {
    %c0_i32 = arith.constant 0 : i32
    %c0_i32_0 = arith.constant 0 : i32
    return %c0_i32, %arg0 : i32, i32
  }
}

</mosaic_0001>

<llo_original>
// kernel: tpu_custom_call.1
$region0: #{tpu_custom_call.1}
  #allocation0 [shape = 'u32[]', space=smem, size = 0x4, offset = 0x4, fixed_abs, tag = 'smem constant byte address 0x4 - core index']
  #allocation1 [shape = 'u32[144,128]{1,0:T(1,128)}', space=vmem, size = 0x12000, scoped, tag = 'internal scratch']
  %s0 = inlined_call_operand.hbm [shape: f32[4,9], index: 0, kind: input, shape index: {}]
  %s1 = inlined_call_operand.hbm [shape: f32[8,128], index: 1, kind: input, shape index: {}]
  %s2 = inlined_call_operand.hbm [shape: f32[1,128], index: 2, kind: output, shape index: {0}]
  %s3 = inlined_call_operand.hbm [shape: s32[1,128], index: 3, kind: output, shape index: {1}]
  %4 = xla_tuple %s2, %s3
  %s5 = sld [smem:[#allocation0]]
  $region34: #{tpu_custom_call.1} parent=0
    _
  %s7 = ssub.s32 1, %s5
  %s8 = scalar_select 0, %s7, %s5
  $region1: #{tpu_custom_call.1} parent=0
    #allocation2 [shape = 'u8[2048]{0}', space=vmem, size = 0x800, scoped, tag = 'input window, operand 0, single buffered']
    #allocation3 [shape = 's32[1]{0}', space=sflag, size = 0x4, scoped, tag = 'scoped memory for tpu_custom_call.1']
    #allocation4 [shape = 's32[1]{0}', space=sflag, size = 0x4, scoped, tag = 'scoped memory for tpu_custom_call.1']
    #allocation5 [shape = 'u8[4096]{0}', space=vmem, size = 0x1000, scoped, tag = 'input window, operand 1, single buffered']
    #allocation6 [shape = 's32[1]{0}', space=sflag, size = 0x4, scoped, tag = 'scoped memory for tpu_custom_call.1']
    #allocation7 [shape = 'u8[512]{0}', space=vmem, size = 0x400, scoped, tag = 'output window, operand 0, single buffered']
    #allocation8 [shape = 'u8[512]{0}', space=vmem, size = 0x400, scoped, tag = 'output window, operand 1, single buffered']
    #allocation9 [shape = 's32[1]{0}', space=sflag, size = 0x4, scoped, tag = 'scoped memory for tpu_custom_call.1']
    %9 = vsyncpa [#allocation3], 0
    %10 = vsyncpa [#allocation6], 0
    %11 = vsyncpa [#allocation4], 0
    %12 = vsyncpa [#allocation9], 0
    // Predicated region
    $region2: #{tpu_custom_call.1} parent=1 // pred_check
      _
    $region3: #{tpu_custom_call.1} parent=1 // pred_check_branch
      %14 = sbr.rel (0) target = $region5
    $region4: #{tpu_custom_call.1} parent=1 // pred_region
      %s16 = ssub.s32 64, 64
      %17 = vsyncadd [#allocation3], %s16
      %s19 = sshll.u32 [#allocation2], 4
      %s20 = int_to_ptr.vmem [resolvable:$true] %s19
      %22 = dma.hbm_to_vmem [thread:$0]  %s0, 64, %s20, [#allocation3]
    $region5: #{tpu_custom_call.1} parent=1 // pred_fallthru
      _
    // Predicated region
    $region6: #{tpu_custom_call.1} parent=1 // pred_check
      _
    $region7: #{tpu_custom_call.1} parent=1 // pred_check_branch
      %24 = sbr.rel (0) target = $region9
    $region8: #{tpu_custom_call.1} parent=1 // pred_region
      %s26 = ssub.s32 128, 128
      %27 = vsyncadd [#allocation6], %s26
      %s29 = sshll.u32 [#allocation5], 4
      %s30 = int_to_ptr.vmem [resolvable:$true] %s29
      %32 = dma.hbm_to_vmem [thread:$0]  %s1, 128, %s30, [#allocation6]
    $region9: #{tpu_custom_call.1} parent=1 // pred_fallthru
      _
    // Predicated region
    $region10: #{tpu_custom_call.1} parent=1 // pred_check
      _
    $region11: #{tpu_custom_call.1} parent=1 // pred_check_branch
      %34 = sbr.rel (0) target = $region13
    $region12: #{tpu_custom_call.1} parent=1 // pred_region
      %35 = dma.done [#allocation3], 64
    $region13: #{tpu_custom_call.1} parent=1 // pred_fallthru
      _
    // Predicated region
    $region14: #{tpu_custom_call.1} parent=1 // pred_check
      _
    $region15: #{tpu_custom_call.1} parent=1 // pred_check_branch
      %37 = sbr.rel (0) target = $region17
    $region16: #{tpu_custom_call.1} parent=1 // pred_region
      %38 = dma.done [#allocation6], 128
    $region17: #{tpu_custom_call.1} parent=1 // pred_fallthru
      _
    %v39 = vld [vmem:[#allocation2] sm:$0xf]
    %v40 = vld [vmem:[#allocation5] sm:$0xff]
    %42 = vset.pattern.permute.xlu0 8
    %43 = vperm.xlu0 %42, %v39
    %v44 = vpop.permute.xlu0 %43
    %46 = vset.pattern.permute.xlu0 0
    %47 = vperm.xlu0 %46, %v39
    %v48 = vpop.permute.xlu0 %47
    %v50 = vlaneseq
    %v51 = vshrl.u32 %v50, 7
    %v52 = vsub.s32 0, %v51
    %v53 = vrot.slane %v40, %v52
    %v54 = vmul.f32 %v48, %v53
    %v55 = vadd.f32 %v44, %v54
    %56 = vset.pattern.permute.xlu0 1
    %57 = vperm.xlu0 %56, %v39
    %v58 = vpop.permute.xlu0 %57
    %v60 = vlaneseq
    %v61 = vshrl.u32 %v60, 7
    %v62 = vsub.s32 1, %v61
    %v63 = vrot.slane %v40, %v62
    %v64 = vmul.f32 %v58, %v63
    %v65 = vadd.f32 %v55, %v64
    %66 = vset.pattern.permute.xlu0 2
    %67 = vperm.xlu0 %66, %v39
    %v68 = vpop.permute.xlu0 %67
    %v70 = vlaneseq
    %v71 = vshrl.u32 %v70, 7
    %v72 = vsub.s32 2, %v71
    %v73 = vrot.slane %v40, %v72
    %v74 = vmul.f32 %v68, %v73
    %v75 = vadd.f32 %v65, %v74
    %76 = vset.pattern.permute.xlu0 3
    %77 = vperm.xlu0 %76, %v39
    %v78 = vpop.permute.xlu0 %77
    %v80 = vlaneseq
    %v81 = vshrl.u32 %v80, 7
    %v82 = vsub.s32 3, %v81
    %v83 = vrot.slane %v40, %v82
    %v84 = vmul.f32 %v78, %v83
    %v85 = vadd.f32 %v75, %v84
    %86 = vset.pattern.permute.xlu0 4
    %87 = vperm.xlu0 %86, %v39
    %v88 = vpop.permute.xlu0 %87
    %v90 = vlaneseq
    %v91 = vshrl.u32 %v90, 7
    %v92 = vsub.s32 4, %v91
    %v93 = vrot.slane %v40, %v92
    %v94 = vmul.f32 %v88, %v93
    %v95 = vadd.f32 %v85, %v94
    %96 = vset.pattern.permute.xlu0 5
    %97 = vperm.xlu0 %96, %v39
    %v98 = vpop.permute.xlu0 %97
    %v100 = vlaneseq
    %v101 = vshrl.u32 %v100, 7
    %v102 = vsub.s32 5, %v101
    %v103 = vrot.slane %v40, %v102
    %v104 = vmul.f32 %v98, %v103
    %v105 = vadd.f32 %v95, %v104
    %106 = vset.pattern.permute.xlu0 6
    %107 = vperm.xlu0 %106, %v39
    %v108 = vpop.permute.xlu0 %107
    %v110 = vlaneseq
    %v111 = vshrl.u32 %v110, 7
    %v112 = vsub.s32 6, %v111
    %v113 = vrot.slane %v40, %v112
    %v114 = vmul.f32 %v108, %v113
    %v115 = vadd.f32 %v105, %v114
    %116 = vset.pattern.permute.xlu0 7
    %117 = vperm.xlu0 %116, %v39
    %v118 = vpop.permute.xlu0 %117
    %v120 = vlaneseq
    %v121 = vshrl.u32 %v120, 7
    %v122 = vsub.s32 7, %v121
    %v123 = vrot.slane %v40, %v122
    %v124 = vmul.f32 %v118, %v123
    %v125 = vadd.f32 %v115, %v124
    %v127 = vrot.slane %v125, 3
    %v129 = vmin.f32 %v125, %v127
    %vm130 = vcmp.le.f32.partialorder %v125, %v127
    %v131 = vsel %vm130, 0, 3
    %v132 = vrot.slane %v125, 1
    %v134 = vmin.f32 %v125, %v132
    %vm135 = vcmp.le.f32.partialorder %v125, %v132
    %v136 = vsel %vm135, 1, 2
    %v138 = vrot.slane %v134, 1
    %v140 = vmax.f32 %v129, %v138
    %vm141 = vcmp.ge.f32.partialorder %v129, %v138
    %v142 = vrot.slane %v136, 1
    %v143 = vsel %vm141, %v131, %v142
    %144 = vst [vmem:[#allocation7] sm:$0x1] %v140
    %145 = vst [vmem:[#allocation8] sm:$0x1] %v143
    // Predicated region
    $region18: #{tpu_custom_call.1} parent=1 // pred_check
      _
    $region19: #{tpu_custom_call.1} parent=1 // pred_check_branch
      %147 = sbr.rel (0) target = $region21
    $region20: #{tpu_custom_call.1} parent=1 // pred_region
      %s149 = ssub.s32 16, 16
      %150 = vsyncadd [#allocation4], %s149
      %s152 = sshll.u32 [#allocation7], 4
      %s153 = int_to_ptr.vmem [resolvable:$true] %s152
      %155 = dma.vmem_to_hbm [thread:$0]  %s153, 16, %s2, [#allocation4]
    $region21: #{tpu_custom_call.1} parent=1 // pred_fallthru
      _
    // Predicated region
    $region22: #{tpu_custom_call.1} parent=1 // pred_check
      _
    $region23: #{tpu_custom_call.1} parent=1 // pred_check_branch
      %157 = sbr.rel (0) target = $region25
    $region24: #{tpu_custom_call.1} parent=1 // pred_region
      %s159 = ssub.s32 16, 16
      %160 = vsyncadd [#allocation9], %s159
      %s162 = sshll.u32 [#allocation8], 4
      %s163 = int_to_ptr.vmem [resolvable:$true] %s162
      %165 = dma.vmem_to_hbm [thread:$0]  %s163, 16, %s3, [#allocation9]
    $region25: #{tpu_custom_call.1} parent=1 // pred_fallthru
      _
    // Predicated region
    $region26: #{tpu_custom_call.1} parent=1 // pred_check
      _
    $region27: #{tpu_custom_call.1} parent=1 // pred_check_branch
      %167 = sbr.rel (0) target = $region29
    $region28: #{tpu_custom_call.1} parent=1 // pred_region
      %168 = dma.done [#allocation4], 16
    $region29: #{tpu_custom_call.1} parent=1 // pred_fallthru
      _
    // Predicated region
    $region30: #{tpu_custom_call.1} parent=1 // pred_check
      _
    $region31: #{tpu_custom_call.1} parent=1 // pred_check_branch
      %170 = sbr.rel (0) target = $region33
    $region32: #{tpu_custom_call.1} parent=1 // pred_region
      %171 = dma.done [#allocation9], 16
    $region33: #{tpu_custom_call.1} parent=1 // pred_fallthru
      _
    %172 = vsyncpa [#allocation3], 1
    %173 = vsyncpa [#allocation6], 1
    %174 = vsyncpa [#allocation4], 1
    %175 = vsyncpa [#allocation9], 1

</llo_original>
